<compile_context>
chip_gen: v6e
topology: v6e:2x2x1
jax: 0.10.0
libtpu: 0.0.40
codegen_flags: <defaults>
</compile_context>

<pallas_src>
import functools

import jax
import jax.numpy as jnp
from jax.experimental import pallas as pl
from jax.experimental.pallas import tpu as pltpu

LANE = 128
SUBLANE_BF16 = 16


def _cdiv(a, b):
    return (a + b - 1) // b


def _round_up(x, m):
    return _cdiv(x, m) * m


def _pad2d(a, rows, cols):
    r, c = a.shape
    if r == rows and c == cols:
        return a
    return jnp.pad(a, ((0, rows - r), (0, cols - c)))


def _vmem_limit_bytes():
    # Per-generation VMEM budget: 64 MiB/TC on v7x vs 128 MiB on v5e/v6e.
    try:
        cap = int(pltpu.get_tpu_info().vmem_capacity_bytes)
    except Exception:
        cap = 64 * 1024 * 1024  # conservative fallback (v7x per-core)
    return max(32 * 1024 * 1024, min(cap * 3 // 4, 100 * 1024 * 1024))


# ------------------------- fused RGCN layer kernel --------------------------

def _fused_layer_kernel(src_blk_ref, et_ref, adj_ref, x_ref, w_ref, b_ref,
                        o_ref, acc_ref, *, relu):
    # src_blk_ref / et_ref are consumed by the index_maps only.
    del src_blk_ref, et_ref
    k = pl.program_id(1)

    @pl.when(k == 0)
    def _():
        acc_ref[...] = jnp.zeros_like(acc_ref)

    # Fused per-edge-type transform: t = x_src_block @ W[etype(k)]
    # (bf16 operands, f32 MXU accumulate, bf16 staging for the second matmul).
    t = jnp.dot(x_ref[...], w_ref[0],
                preferred_element_type=jnp.float32).astype(jnp.bfloat16)
    # Aggregation over the "arbitrary" K axis: acc += Ahat_tile @ t.
    acc_ref[...] += jnp.dot(adj_ref[...], t, preferred_element_type=jnp.float32)

    @pl.when(k == pl.num_programs(1) - 1)
    def _():
        y = acc_ref[...] + b_ref[...]
        if relu:
            y = jnp.maximum(y, 0.0)
        o_ref[...] = y.astype(o_ref.dtype)


def pallas_fused_aggregate(src_blk, et_idx, adj, x_slab, w_stack, b_sum, *,
                           tk, tm, relu, out_dtype, vmem_limit):
    """out = relu?(sum_k Ahat[:, k-block] @ (X[src_blk[k]] @ W[et[k]]) + b_sum).

    adj     : (Mp, Kp)  bf16 tk-aligned concatenated normalized adjacency.
    x_slab  : (R, F)    bf16 stacked (tk-aligned per node type) source features.
    w_stack : (E, F, N) bf16 stacked per-edge-type weights.
    b_sum   : (1, N)    f32  summed biases of the incoming edge types.
    src_blk / et_idx : (nb,) int32 scalar-prefetched per-K-block tables.
    """
    Mp, Kp = adj.shape
    _, F = x_slab.shape
    _, Fw, N = w_stack.shape
    assert Fw == F and Kp % tk == 0 and Mp % tm == 0
    nb = Kp // tk
    grid = (Mp // tm, nb)

    flops = (Mp // tm) * nb * (2 * tm * F * N + 2 * tm * tk * N)
    bytes_accessed = (Mp * Kp * 2                      # adjacency stream
                      + (Mp // tm) * Kp * F * 2        # x blocks (upper bound)
                      + (Mp // tm) * nb * F * N * 2    # weight blocks (upper bound)
                      + N * 4
                      + Mp * N * jnp.dtype(out_dtype).itemsize)

    return pl.pallas_call(
        functools.partial(_fused_layer_kernel, relu=relu),
        out_shape=jax.ShapeDtypeStruct((Mp, N), out_dtype),
        grid_spec=pltpu.PrefetchScalarGridSpec(
            num_scalar_prefetch=2,
            grid=grid,
            in_specs=[
                pl.BlockSpec((tm, tk), lambda i, k, sb, et: (i, k)),      # adjacency tile
                pl.BlockSpec((tk, F), lambda i, k, sb, et: (sb[k], 0)),   # source-feature block
                pl.BlockSpec((1, F, N), lambda i, k, sb, et: (et[k], 0, 0)),  # edge-type weight
                pl.BlockSpec((1, N), lambda i, k, sb, et: (0, 0)),        # summed bias
            ],
            out_specs=pl.BlockSpec((tm, N), lambda i, k, sb, et: (i, 0)),
            scratch_shapes=[pltpu.VMEM((tm, N), jnp.float32)],
        ),
        compiler_params=pltpu.CompilerParams(
            dimension_semantics=("parallel", "arbitrary"),
            vmem_limit_bytes=vmem_limit),
        cost_estimate=pl.CostEstimate(flops=flops, transcendentals=0,
                                      bytes_accessed=bytes_accessed),
    )(src_blk, et_idx, adj, x_slab, w_stack, b_sum)


# ------------------------------ graph prep ----------------------------------

def prepare_graph(node_types, num_nodes, edge_types, adj_norm, *,
                  tk_max, tm_max, feat_pad_max, vmem_limit):
    """Precompute static fused-layer operands (graph structure, not features)."""
    max_n = max(num_nodes.values())
    tk = min(tk_max, _round_up(max_n, LANE))

    node_rows = {nt: _round_up(num_nodes[nt], tk) for nt in node_types}
    base_block, off = {}, 0
    for nt in node_types:
        base_block[nt] = off // tk
        off += node_rows[nt]
    slab_rows = off

    et_global = {et: i for i, et in enumerate(edge_types)}
    in_edges = {nt: [et for et in edge_types if et[2] == nt] for nt in node_types}

    per_dst = {}
    for dst in node_types:
        ets = in_edges[dst]
        if not ets:
            # TODO(synk): HeteroGraphConv emits no output for node types with no
            # incoming edge types; we mirror that (their slab rows stay zero).
            continue
        n = num_nodes[dst]

        # Destination row tile: multiple of 16 (bf16 sublane pack), sized so the
        # last tile isn't mostly padding, capped by tm_max and the VMEM budget.
        blocks = _cdiv(n, tm_max)
        tm = _round_up(_cdiv(n, blocks), SUBLANE_BF16)

        def vmem_use(tm_):
            return (2 * tm_ * tk * 2            # double-buffered adj tile
                    + 2 * tk * feat_pad_max * 2  # double-buffered x tile
                    + 2 * feat_pad_max * feat_pad_max * 2  # weight tile
                    + tm_ * feat_pad_max * 4     # f32 accumulator
                    + 2 * tm_ * feat_pad_max * 4  # output buffers
                    + 2 * feat_pad_max * 4)      # bias
        while vmem_use(tm) > vmem_limit and tm > SUBLANE_BF16:
            tm = max(SUBLANE_BF16, _round_up(tm // 2, SUBLANE_BF16))
        Mp = _round_up(n, tm)

        cols, src_blocks, et_ids = [], [], []
        for et in ets:
            src = et[0]
            a = _pad2d(adj_norm[et], n, node_rows[src])  # tk-aligned columns
            cols.append(a)
            for j in range(node_rows[src] // tk):
                src_blocks.append(base_block[src] + j)
                et_ids.append(et_global[et])
        adj_cat = cols[0] if len(cols) == 1 else jnp.concatenate(cols, axis=1)
        adj_cat = _pad2d(adj_cat, Mp, adj_cat.shape[1]).astype(jnp.bfloat16)

        per_dst[dst] = dict(
            ets=ets,
            et_global_ids=[et_global[et] for et in ets],
            adj=adj_cat,
            src_blk=jnp.asarray(src_blocks, dtype=jnp.int32),
            et_idx=jnp.asarray(et_ids, dtype=jnp.int32),
            tm=tm, n_dst=n)

    return dict(tk=tk, node_rows=node_rows, base_block=base_block,
                slab_rows=slab_rows, per_dst=per_dst, in_edges=in_edges)


def build_feature_slab(feat_dict, graph, node_types, f_pad,
                       dtype=jnp.bfloat16):
    """Stack per-node-type features into one tk-aligned slab (rows grouped by type)."""
    parts = []
    for nt in node_types:
        rows = graph["node_rows"][nt]
        h = feat_dict.get(nt)
        if h is None:
            parts.append(jnp.zeros((rows, f_pad), dtype))
        else:
            r = min(h.shape[0], rows)
            parts.append(_pad2d(h[:r].astype(dtype), rows, f_pad))
    return jnp.concatenate(parts, axis=0)


# ------------------------------ RGCN forward --------------------------------

def fused_rgcn_layer(x_slab, w_stack, b_stack, graph, *, relu, out_dtype,
                     vmem_limit):
    """One HeteroGraphConv({etype: GraphConv}) layer, sum-aggregated, fully fused."""
    out = {}
    for dst, g in graph["per_dst"].items():
        ids = jnp.asarray(g["et_global_ids"], dtype=jnp.int32)
        b_sum = jnp.sum(b_stack[ids], axis=0, keepdims=True)
        out[dst] = pallas_fused_aggregate(
            g["src_blk"], g["et_idx"], g["adj"], x_slab, w_stack, b_sum,
            tk=graph["tk"], tm=g["tm"], relu=relu, out_dtype=out_dtype,
            vmem_limit=vmem_limit)
    return out


def rgcn_forward(x_slab, params, graph, node_types):
    vmem_limit = _vmem_limit_bytes()
    w1, b1 = params["layer1"]
    w2, b2 = params["layer2"]
    h1 = fused_rgcn_layer(x_slab, w1, b1, graph, relu=True,
                          out_dtype=jnp.bfloat16, vmem_limit=vmem_limit)
    # Layer-2 source slab; rows past each type's node count carry padding values
    # but their adjacency columns are zero, so they never contribute.
    h1_slab = build_feature_slab(h1, graph, node_types, w2.shape[1],
                                 dtype=jnp.bfloat16)
    h2 = fused_rgcn_layer(h1_slab, w2, b2, graph, relu=False,
                          out_dtype=jnp.bfloat16, vmem_limit=vmem_limit)
    return {dst: h2[dst][:graph["per_dst"][dst]["n_dst"]].astype(jnp.float32)
            for dst in h2}


# ----------------------- pure-JAX reference (bf16-matched) ------------------

def ref_forward(x_dict, params, adj_norm):
    def layer(h, weights, relu):
        out = {}
        for et, (w, b) in weights.items():
            src, _, dst = et
            if src not in h:
                continue
            t = jnp.dot(h[src].astype(jnp.bfloat16), w.astype(jnp.bfloat16),
                        preferred_element_type=jnp.float32).astype(jnp.bfloat16)
            m = jnp.dot(adj_norm[et].astype(jnp.bfloat16), t,
                        preferred_element_type=jnp.float32) + b
            out[dst] = m if dst not in out else out[dst] + m
        if relu:
            out = {k: jnp.maximum(v, 0.0) for k, v in out.items()}
        return out

    h = layer(x_dict, params["layer1"], relu=True)
    h = {k: v.astype(jnp.bfloat16) for k, v in h.items()}  # kernel stores bf16
    return layer(h, params["layer2"], relu=False)


# ---------------------------------- setup -----------------------------------

def glorot(key, shape):
    fan_in, fan_out = shape
    lim = (6.0 / (fan_in + fan_out)) ** 0.5
    return jax.random.uniform(key, shape, jnp.float32, -lim, lim)


def stack_layer_params(weights, edge_types, fin_pad, fout_pad):
    ws, bs = [], []
    for et in edge_types:
        w, b = weights[et]
        ws.append(_pad2d(w, fin_pad, fout_pad).astype(jnp.bfloat16))
        bs.append(jnp.pad(b, (0, fout_pad - b.shape[0])).astype(jnp.float32))
    return jnp.stack(ws, axis=0), jnp.stack(bs, axis=0)


if __name__ == "__main__":
    key = jax.random.PRNGKey(0)

    node_types = ["author", "paper"]
    edge_types = [("author", "writes", "paper"),
                  ("paper", "rev_writes", "author"),
                  ("paper", "cites", "paper")]
    num_nodes = {"author": 60, "paper": 100}
    in_feats, hidden_feats, out_feats = 48, 64, 16

    in_pad = _round_up(in_feats, LANE)
    hid_pad = _round_up(hidden_feats, LANE)
    out_pad = _round_up(out_feats, LANE)

    keys = iter(jax.random.split(key, 64))

    # Node features (all node types share in_feats, as the module requires).
    x_dict = {nt: jax.random.normal(next(keys), (num_nodes[nt], in_feats),
                                    jnp.float32)
              for nt in node_types}

    # Dense, symmetrically normalized adjacency per edge type (GraphConv norm='both').
    # TODO(synk): DGL's sparse message passing is represented here as a dense
    # normalized-adjacency matmul.
    adj_norm = {}
    for (src, rel, dst) in edge_types:
        mask = (jax.random.uniform(next(keys),
                                   (num_nodes[dst], num_nodes[src])) < 0.15)
        a = mask.astype(jnp.float32)
        deg_dst = jnp.maximum(a.sum(axis=1, keepdims=True), 1.0)
        deg_src = jnp.maximum(a.sum(axis=0, keepdims=True), 1.0)
        adj_norm[(src, rel, dst)] = a / jnp.sqrt(deg_dst) / jnp.sqrt(deg_src)

    # Per-edge-type GraphConv parameters (glorot weights, small biases).
    def make_layer(fin, fout):
        return {et: (glorot(next(keys), (fin, fout)),
                     0.01 * jax.random.normal(next(keys), (fout,), jnp.float32))
                for et in edge_types}

    params_ref = {"layer1": make_layer(in_feats, hidden_feats),
                  "layer2": make_layer(hidden_feats, out_feats)}

    # ---- kernel-side operands: stacked slab, stacked weights, fused adjacency ----
    vmem_limit = _vmem_limit_bytes()
    feat_pad_max = max(in_pad, hid_pad, out_pad)
    graph = prepare_graph(node_types, num_nodes, edge_types, adj_norm,
                          tk_max=1024, tm_max=1024,
                          feat_pad_max=feat_pad_max, vmem_limit=vmem_limit)

    kparams = {
        "layer1": stack_layer_params(params_ref["layer1"], edge_types,
                                     in_pad, hid_pad),
        "layer2": stack_layer_params(params_ref["layer2"], edge_types,
                                     hid_pad, out_pad),
    }
    x_slab = build_feature_slab(x_dict, graph, node_types, in_pad,
                                dtype=jnp.bfloat16)

    out = rgcn_forward(x_slab, kparams, graph, node_types)
    out = jax.block_until_ready(out)

    ref = ref_forward(x_dict, params_ref, adj_norm)
    for nt in ref:
        got = out[nt][:, :out_feats]
        assert got.shape == ref[nt].shape, (got.shape, ref[nt].shape)
        err = jnp.max(jnp.abs(got - ref[nt]))
        assert jnp.allclose(got, ref[nt], rtol=2e-2, atol=2e-2), \
            f"mismatch for node type {nt}: max abs err {err}"

    print("KERNEL_OK")
</pallas_src>

<mosaic_0001>
module attributes {stable_mosaic.version = 11 : i64} {
  func.func @_fused_layer_kernel(%arg0: i32, %arg1: i32, %arg2: memref<1xi32, #tpu.memory_space<smem>>, %arg3: memref<1xi32, #tpu.memory_space<smem>>, %arg4: memref<64x128xbf16, #tpu.memory_space<vmem>>, %arg5: memref<128x128xbf16, #tpu.memory_space<vmem>>, %arg6: memref<1x128x128xbf16, #tpu.memory_space<vmem>>, %arg7: memref<1x128xf32, #tpu.memory_space<vmem>>, %arg8: memref<64x128xbf16, #tpu.memory_space<vmem>>, %arg9: memref<64x128xf32, #tpu.memory_space<vmem>>) attributes {dimension_semantics = [#tpu.dimension_semantics<parallel>, #tpu.dimension_semantics<arbitrary>], iteration_bounds = array<i64: 1, 1>, scalar_prefetch = 2 : i64, scratch_operands = 1 : i64, tpu.core_type = #tpu.core_type<tc>, window_params = [{transform_indices = @transform_0, window_bounds = array<i64: 64, 128>}, {transform_indices = @transform_1, window_bounds = array<i64: 128, 128>}, {transform_indices = @transform_2, window_bounds = array<i64: 1, 128, 128>}, {pipeline_mode = #tpu.pipeline_mode<synchronous>, transform_indices = @transform_3, window_bounds = array<i64: 1, 128>}, {transform_indices = @transform_4, window_bounds = array<i64: 64, 128>}]} {
    %c0_i32 = arith.constant 0 : i32
    %0 = arith.cmpi eq, %arg1, %c0_i32 : i32
    %1 = arith.extui %0 : i1 to i32
    %c0_i32_0 = arith.constant 0 : i32
    %2 = arith.cmpi ne, %1, %c0_i32_0 : i32
    scf.if %2 {
      %cst_14 = arith.constant 0.000000e+00 : f32
      %16 = vector.broadcast %cst_14 : f32 to vector<64x128xf32>
      %c0_15 = arith.constant 0 : index
      %c0_16 = arith.constant 0 : index
      %17 = vector.load %arg9[%c0_15, %c0_16] : memref<64x128xf32, #tpu.memory_space<vmem>>, vector<64x128xf32>
      tpu.vector_store %arg9[%c0_15, %c0_16], %16 {strides = array<i32>} : memref<64x128xf32, #tpu.memory_space<vmem>>, vector<64x128xf32>,
    } else {
    }
    %c0 = arith.constant 0 : index
    %c0_1 = arith.constant 0 : index
    %3 = vector.load %arg5[%c0, %c0_1] : memref<128x128xbf16, #tpu.memory_space<vmem>>, vector<128x128xbf16>
    %c0_2 = arith.constant 0 : index
    %c0_3 = arith.constant 0 : index
    %c0_4 = arith.constant 0 : index
    %4 = vector.load %arg6[%c0_2, %c0_3, %c0_4] : memref<1x128x128xbf16, #tpu.memory_space<vmem>>, vector<1x128x128xbf16>
    %5 = vector.shape_cast %4 : vector<1x128x128xbf16> to vector<128x128xbf16>
    %cst = arith.constant dense<0.000000e+00> : vector<128x128xf32>
    %6 = tpu.matmul %3, %5, %cst {dimension_numbers = #tpu.dot_dimension_numbers<[1], [0], [0], [1], [0, 0, 1, 1], [], []>} : vector<128x128xbf16>, vector<128x128xbf16>, vector<128x128xf32> -> vector<128x128xf32>
    %7 = arith.truncf %6 : vector<128x128xf32> to vector<128x128xbf16>
    %c0_5 = arith.constant 0 : index
    %c0_6 = arith.constant 0 : index
    %8 = vector.load %arg9[%c0_5, %c0_6] : memref<64x128xf32, #tpu.memory_space<vmem>>, vector<64x128xf32>
    %c0_7 = arith.constant 0 : index
    %c0_8 = arith.constant 0 : index
    %9 = vector.load %arg4[%c0_7, %c0_8] : memref<64x128xbf16, #tpu.memory_space<vmem>>, vector<64x128xbf16>
    %cst_9 = arith.constant dense<0.000000e+00> : vector<64x128xf32>
    %10 = tpu.matmul %9, %7, %cst_9 {dimension_numbers = #tpu.dot_dimension_numbers<[1], [0], [0], [1], [0, 0, 1, 1], [], []>} : vector<64x128xbf16>, vector<128x128xbf16>, vector<64x128xf32> -> vector<64x128xf32>
    %11 = arith.addf %8, %10 : vector<64x128xf32>
    %c0_10 = arith.constant 0 : index
    %c0_11 = arith.constant 0 : index
    %12 = vector.load %arg9[%c0_10, %c0_11] : memref<64x128xf32, #tpu.memory_space<vmem>>, vector<64x128xf32>
    tpu.vector_store %arg9[%c0_10, %c0_11], %11 {strides = array<i32>} : memref<64x128xf32, #tpu.memory_space<vmem>>, vector<64x128xf32>,
    %c0_i32_12 = arith.constant 0 : i32
    %13 = arith.cmpi eq, %arg1, %c0_i32_12 : i32
    %14 = arith.extui %13 : i1 to i32
    %c0_i32_13 = arith.constant 0 : i32
    %15 = arith.cmpi ne, %14, %c0_i32_13 : i32
    scf.if %15 {
      %c0_14 = arith.constant 0 : index
      %c0_15 = arith.constant 0 : index
      %16 = vector.load %arg9[%c0_14, %c0_15] : memref<64x128xf32, #tpu.memory_space<vmem>>, vector<64x128xf32>
      %c0_16 = arith.constant 0 : index
      %c0_17 = arith.constant 0 : index
      %17 = vector.load %arg7[%c0_16, %c0_17] : memref<1x128xf32, #tpu.memory_space<vmem>>, vector<1x128xf32>
      %18 = vector.broadcast %17 : vector<1x128xf32> to vector<64x128xf32>
      %19 = arith.addf %16, %18 : vector<64x128xf32>
      %cst_18 = arith.constant 0.000000e+00 : f32
      %20 = vector.broadcast %cst_18 : f32 to vector<64x128xf32>
      %21 = arith.maximumf %19, %20 : vector<64x128xf32>
      %22 = arith.truncf %21 : vector<64x128xf32> to vector<64x128xbf16>
      %c0_19 = arith.constant 0 : index
      %c0_20 = arith.constant 0 : index
      %23 = vector.load %arg8[%c0_19, %c0_20] : memref<64x128xbf16, #tpu.memory_space<vmem>>, vector<64x128xbf16>
      tpu.vector_store %arg8[%c0_19, %c0_20], %22 {strides = array<i32>} : memref<64x128xbf16, #tpu.memory_space<vmem>>, vector<64x128xbf16>,
    } else {
    }
    return
  }
  func.func @transform_0(%arg0: i32, %arg1: i32, %arg2: memref<1xi32, #tpu.memory_space<smem>>, %arg3: memref<1xi32, #tpu.memory_space<smem>>) -> (i32, i32) {
    %c0_i32 = arith.constant 0 : i32
    return %arg0, %arg1 : i32, i32
  }
  func.func @transform_1(%arg0: i32, %arg1: i32, %arg2: memref<1xi32, #tpu.memory_space<smem>>, %arg3: memref<1xi32, #tpu.memory_space<smem>>) -> (i32, i32) {
    %0 = arith.index_cast %arg1 : i32 to index
    %1 = memref.load %arg2[%0] : memref<1xi32, #tpu.memory_space<smem>>
    %c0_i32 = arith.constant 0 : i32
    %c0_i32_0 = arith.constant 0 : i32
    return %1, %c0_i32 : i32, i32
  }
  func.func @transform_2(%arg0: i32, %arg1: i32, %arg2: memref<1xi32, #tpu.memory_space<smem>>, %arg3: memref<1xi32, #tpu.memory_space<smem>>) -> (i32, i32, i32) {
    %0 = arith.index_cast %arg1 : i32 to index
    %1 = memref.load %arg3[%0] : memref<1xi32, #tpu.memory_space<smem>>
    %c0_i32 = arith.constant 0 : i32
    %c0_i32_0 = arith.constant 0 : i32
    %c0_i32_1 = arith.constant 0 : i32
    return %1, %c0_i32, %c0_i32_0 : i32, i32, i32
  }
  func.func @transform_3(%arg0: i32, %arg1: i32, %arg2: memref<1xi32, #tpu.memory_space<smem>>, %arg3: memref<1xi32, #tpu.memory_space<smem>>) -> (i32, i32) {
    %c0_i32 = arith.constant 0 : i32
    %c0_i32_0 = arith.constant 0 : i32
    %c0_i32_1 = arith.constant 0 : i32
    return %c0_i32, %c0_i32_0 : i32, i32
  }
  func.func @transform_4(%arg0: i32, %arg1: i32, %arg2: memref<1xi32, #tpu.memory_space<smem>>, %arg3: memref<1xi32, #tpu.memory_space<smem>>) -> (i32, i32) {
    %c0_i32 = arith.constant 0 : i32
    %c0_i32_0 = arith.constant 0 : i32
    return %arg0, %c0_i32 : i32, i32
  }
}

</mosaic_0001>

<llo_original>
// kernel: tpu_custom_call.1
$region0: #{tpu_custom_call.1}
  #allocation0 [shape = 'u32[]', space=smem, size = 0x4, offset = 0x4, fixed_abs, tag = 'smem constant byte address 0x4 - core index']
  #allocation1 [shape = 'u32[144,128]{1,0:T(1,128)}', space=vmem, size = 0x12000, scoped, tag = 'internal scratch']
  #allocation2 [shape = 'f32[64,128]{1,0:T(8,128)}', space=vmem, size = 0x8000, scoped, tag = 'scratch operand']
  #allocation3 [shape = 's32[1]{0}', space=sflag, size = 0x4, scoped, tag = 'scoped memory for tpu_custom_call.1']
  #allocation4 [shape = 's32[1]{0:T(128)S(6)}', space=smem, size = 0x200, scoped, tag = 'prefetched SMEM operand 0']
  #allocation5 [shape = 's32[1]{0:T(128)S(6)}', space=smem, size = 0x200, scoped, tag = 'prefetched SMEM operand 1']
  %s0 = inlined_call_operand.<no memory space> [shape: s32[1], index: 0, kind: input, shape index: {}]
  %s1 = inlined_call_operand.<no memory space> [shape: s32[1], index: 1, kind: input, shape index: {}]
  %s2 = inlined_call_operand.hbm [shape: bf16[64,128], index: 2, kind: input, shape index: {}]
  %s3 = inlined_call_operand.hbm [shape: bf16[256,128], index: 3, kind: input, shape index: {}]
  %s4 = inlined_call_operand.hbm [shape: bf16[3,128,128], index: 4, kind: input, shape index: {}]
  %s5 = inlined_call_operand.vmem [shape: f32[1,128], index: 5, kind: input, shape index: {}]
  %s6 = inlined_call_operand.hbm [shape: bf16[64,128], index: 6, kind: output, shape index: {}]
  %s7 = sld [smem:[#allocation0]]
  $region46: #{tpu_custom_call.1} parent=0
    _
  %s9 = ssub.s32 1, %s7
  %s10 = scalar_select 0, %s9, %s7
  %11 = sst [smem:[#allocation4]] %s0
  %12 = sst [smem:[#allocation5]] %s1
  $region1: #{tpu_custom_call.1} parent=0
    #allocation6 [shape = 'u8[16384]{0}', space=vmem, size = 0x4000, scoped, tag = 'input window, operand 2, single buffered']
    #allocation7 [shape = 's32[1]{0}', space=sflag, size = 0x4, scoped, tag = 'scoped memory for tpu_custom_call.1']
    #allocation8 [shape = 's32[1]{0}', space=sflag, size = 0x4, scoped, tag = 'scoped memory for tpu_custom_call.1']
    #allocation9 [shape = 'u8[32768]{0}', space=vmem, size = 0x8000, scoped, tag = 'input window, operand 3, single buffered']
    #allocation10 [shape = 's32[1]{0}', space=sflag, size = 0x4, scoped, tag = 'scoped memory for tpu_custom_call.1']
    #allocation11 [shape = 'u8[32768]{0}', space=vmem, size = 0x8000, scoped, tag = 'input window, operand 4, single buffered']
    #allocation12 [shape = 'u8[16384]{0}', space=vmem, size = 0x4000, scoped, tag = 'output window, operand 0, single buffered']
    %13 = vsyncpa [#allocation7], 0
    %14 = vsyncpa [#allocation10], 0
    %15 = vsyncpa [#allocation8], 0
    // Predicated region
    $region2: #{tpu_custom_call.1} parent=1 // pred_check
      _
    $region3: #{tpu_custom_call.1} parent=1 // pred_check_branch
      %17 = sbr.rel (0) target = $region5
    $region4: #{tpu_custom_call.1} parent=1 // pred_region
      %s19 = ssub.s32 512, 512
      %20 = vsyncadd [#allocation7], %s19
      %s21 = sshll.u32 [#allocation6], 4
      %s22 = int_to_ptr.vmem [resolvable:$true] %s21
      %27 = dma.hbm_to_vmem [thread:$0]  %s2, 512, %s22, [#allocation7], 64, 64, 4
    $region5: #{tpu_custom_call.1} parent=1 // pred_fallthru
      _
    // Predicated region
    $region6: #{tpu_custom_call.1} parent=1 // pred_check
      _
    $region7: #{tpu_custom_call.1} parent=1 // pred_check_branch
      %29 = sbr.rel (0) target = $region9
    $region8: #{tpu_custom_call.1} parent=1 // pred_region
      %s30 = sld [smem:[#allocation4]]
      %s31 = smul.u32 16, %s30
      %s33 = ssub.s32 1024, 1024
      %34 = vsyncadd [#allocation10], %s33
      %s35 = smul.addr %s31, 64
      %s36 = scalar_lea.hbm %s3, %s35
      %s37 = sshll.u32 [#allocation9], 4
      %s38 = int_to_ptr.vmem [resolvable:$true] %s37
      %43 = dma.hbm_to_vmem [thread:$0]  %s36, 1024, %s38, [#allocation10], 64, 64, 4
    $region9: #{tpu_custom_call.1} parent=1 // pred_fallthru
      _
    // Predicated region
    $region10: #{tpu_custom_call.1} parent=1 // pred_check
      _
    $region11: #{tpu_custom_call.1} parent=1 // pred_check_branch
      %45 = sbr.rel (0) target = $region13
    $region12: #{tpu_custom_call.1} parent=1 // pred_region
      %s46 = sld [smem:[#allocation5]]
      %s48 = ssub.s32 1024, 1024
      %49 = vsyncadd [#allocation10], %s48
      %s50 = smul.addr %s46, 16
      %s51 = smul.addr %s50, 64
      %s52 = scalar_lea.hbm %s4, %s51
      %s53 = sshll.u32 [#allocation11], 4
      %s54 = int_to_ptr.vmem [resolvable:$true] %s53
      %59 = dma.hbm_to_vmem [thread:$0]  %s52, 1024, %s54, [#allocation10], 64, 64, 4
    $region13: #{tpu_custom_call.1} parent=1 // pred_fallthru
      _
    // Predicated region
    $region14: #{tpu_custom_call.1} parent=1 // pred_check
      _
    $region15: #{tpu_custom_call.1} parent=1 // pred_check_branch
      %61 = sbr.rel (0) target = $region17
    $region16: #{tpu_custom_call.1} parent=1 // pred_region
      _
    $region17: #{tpu_custom_call.1} parent=1 // pred_fallthru
      _
    // Predicated region
    $region18: #{tpu_custom_call.1} parent=1 // pred_check
      _
    $region19: #{tpu_custom_call.1} parent=1 // pred_check_branch
      %63 = sbr.rel (0) target = $region21
    $region20: #{tpu_custom_call.1} parent=1 // pred_region
      %64 = dma.done [#allocation7], 512
    $region21: #{tpu_custom_call.1} parent=1 // pred_fallthru
      _
    // Predicated region
    $region22: #{tpu_custom_call.1} parent=1 // pred_check
      _
    $region23: #{tpu_custom_call.1} parent=1 // pred_check_branch
      %66 = sbr.rel (0) target = $region25
    $region24: #{tpu_custom_call.1} parent=1 // pred_region
      %67 = dma.done [#allocation10], 1024
    $region25: #{tpu_custom_call.1} parent=1 // pred_fallthru
      _
    // Predicated region
    $region26: #{tpu_custom_call.1} parent=1 // pred_check
      _
    $region27: #{tpu_custom_call.1} parent=1 // pred_check_branch
      %69 = sbr.rel (0) target = $region29
    $region28: #{tpu_custom_call.1} parent=1 // pred_region
      %70 = dma.done [#allocation10], 1024
    $region29: #{tpu_custom_call.1} parent=1 // pred_fallthru
      _
    %s71 = sld [smem:[#allocation4]]
    %s72 = smul.u32 16, %s71
    %s73 = sld [smem:[#allocation5]]
    %p75 = scmp.eq.s32.totalorder 0, 0
    // Predicated region
    $region30: #{tpu_custom_call.1} parent=1 // pred_check
      %p76 = pneg %p75
    $region31: #{tpu_custom_call.1} parent=1 // pred_check_branch
      %78 = sbr.rel (%p76) target = $region33
    $region32: #{tpu_custom_call.1} parent=1 // pred_region
      %79 = vst [vmem:[#allocation2] sm:$0xff] 0.0
      %80 = vst [vmem:[#allocation2 + $0x8] sm:$0xff] 0.0
      %81 = vst [vmem:[#allocation2 + $0x10] sm:$0xff] 0.0
      %82 = vst [vmem:[#allocation2 + $0x18] sm:$0xff] 0.0
      %83 = vst [vmem:[#allocation2 + $0x20] sm:$0xff] 0.0
      %84 = vst [vmem:[#allocation2 + $0x28] sm:$0xff] 0.0
      %85 = vst [vmem:[#allocation2 + $0x30] sm:$0xff] 0.0
      %86 = vst [vmem:[#allocation2 + $0x38] sm:$0xff] 0.0
    $region33: #{tpu_custom_call.1} parent=1 // pred_fallthru
      _
    %v87 = vld [vmem:[#allocation9] sm:$0xf]
    %v88 = vld [vmem:[#allocation9 + $0x4] sm:$0xf]
    %v89 = vld [vmem:[#allocation9 + $0x8] sm:$0xf]
    %v90 = vld [vmem:[#allocation9 + $0xc] sm:$0xf]
    %v91 = vld [vmem:[#allocation9 + $0x10] sm:$0xf]
    %v92 = vld [vmem:[#allocation9 + $0x14] sm:$0xf]
    %v93 = vld [vmem:[#allocation9 + $0x18] sm:$0xf]
    %v94 = vld [vmem:[#allocation9 + $0x1c] sm:$0xf]
    %v95 = vld [vmem:[#allocation9 + $0x20] sm:$0xf]
    %v96 = vld [vmem:[#allocation9 + $0x24] sm:$0xf]
    %v97 = vld [vmem:[#allocation9 + $0x28] sm:$0xf]
    %v98 = vld [vmem:[#allocation9 + $0x2c] sm:$0xf]
    %v99 = vld [vmem:[#allocation9 + $0x30] sm:$0xf]
    %v100 = vld [vmem:[#allocation9 + $0x34] sm:$0xf]
    %v101 = vld [vmem:[#allocation9 + $0x38] sm:$0xf]
    %v102 = vld [vmem:[#allocation9 + $0x3c] sm:$0xf]
    %v103 = vld [vmem:[#allocation11] sm:$0xf]
    %v104 = vld [vmem:[#allocation11 + $0x4] sm:$0xf]
    %v105 = vld [vmem:[#allocation11 + $0x8] sm:$0xf]
    %v106 = vld [vmem:[#allocation11 + $0xc] sm:$0xf]
    %v107 = vld [vmem:[#allocation11 + $0x10] sm:$0xf]
    %v108 = vld [vmem:[#allocation11 + $0x14] sm:$0xf]
    %v109 = vld [vmem:[#allocation11 + $0x18] sm:$0xf]
    %v110 = vld [vmem:[#allocation11 + $0x1c] sm:$0xf]
    %v111 = vld [vmem:[#allocation11 + $0x20] sm:$0xf]
    %v112 = vld [vmem:[#allocation11 + $0x24] sm:$0xf]
    %v113 = vld [vmem:[#allocation11 + $0x28] sm:$0xf]
    %v114 = vld [vmem:[#allocation11 + $0x2c] sm:$0xf]
    %v115 = vld [vmem:[#allocation11 + $0x30] sm:$0xf]
    %v116 = vld [vmem:[#allocation11 + $0x34] sm:$0xf]
    %v117 = vld [vmem:[#allocation11 + $0x38] sm:$0xf]
    %v118 = vld [vmem:[#allocation11 + $0x3c] sm:$0xf]
    %v135 = vunpack.c.l.b16 %v87
    %v136 = vunpack.c.l.b16 %v88
    %v137 = vunpack.c.l.b16 %v89
    %v138 = vunpack.c.l.b16 %v90
    %v139 = vunpack.c.l.b16 %v91
    %v140 = vunpack.c.l.b16 %v92
    %v141 = vunpack.c.l.b16 %v93
    %v142 = vunpack.c.l.b16 %v94
    %v143 = vunpack.c.l.b16 %v95
    %v144 = vunpack.c.l.b16 %v96
    %v145 = vunpack.c.l.b16 %v97
    %v146 = vunpack.c.l.b16 %v98
    %v147 = vunpack.c.l.b16 %v99
    %v148 = vunpack.c.l.b16 %v100
    %v149 = vunpack.c.l.b16 %v101
    %v150 = vunpack.c.l.b16 %v102
    %v151 = vpack.c.b16 %v136, %v135
    %v152 = vpack.c.b16 %v138, %v137
    %v153 = vpack.c.b16 %v140, %v139
    %v154 = vpack.c.b16 %v142, %v141
    %v155 = vpack.c.b16 %v144, %v143
    %v156 = vpack.c.b16 %v146, %v145
    %v157 = vpack.c.b16 %v148, %v147
    %v158 = vpack.c.b16 %v150, %v149
    %v183 = vunpack.c.l.b16 %v103
    %v184 = vunpack.c.l.b16 %v104
    %v185 = vunpack.c.l.b16 %v105
    %v186 = vunpack.c.l.b16 %v106
    %v187 = vunpack.c.l.b16 %v107
    %v188 = vunpack.c.l.b16 %v108
    %v189 = vunpack.c.l.b16 %v109
    %v190 = vunpack.c.l.b16 %v110
    %v191 = vunpack.c.l.b16 %v111
    %v192 = vunpack.c.l.b16 %v112
    %v193 = vunpack.c.l.b16 %v113
    %v194 = vunpack.c.l.b16 %v114
    %v195 = vunpack.c.l.b16 %v115
    %v196 = vunpack.c.l.b16 %v116
    %v197 = vunpack.c.l.b16 %v117
    %v198 = vunpack.c.l.b16 %v118
    %v199 = vpack.c.b16 %v184, %v183
    %v200 = vpack.c.b16 %v186, %v185
    %v201 = vpack.c.b16 %v188, %v187
    %v202 = vpack.c.b16 %v190, %v189
    %v203 = vpack.c.b16 %v192, %v191
    %v204 = vpack.c.b16 %v194, %v193
    %v205 = vpack.c.b16 %v196, %v195
    %v206 = vpack.c.b16 %v198, %v197
    %215 = vmatprep.subr.bf16.mxu0 0
    %216 = vmatpush1.bf16.msra.mxu0 %v206
    %217 = vmatprep.subr.bf16.mxu0 0
    %218 = vmatpush1.bf16.msra.mxu0 %v205
    %219 = vmatprep.subr.bf16.mxu0 0
    %220 = vmatpush1.bf16.msra.mxu0 %v204
    %221 = vmatprep.subr.bf16.mxu0 0
    %222 = vmatpush1.bf16.msra.mxu0 %v203
    %223 = vmatprep.subr.bf16.mxu0 0
    %224 = vmatpush1.bf16.msra.mxu0 %v202
    %225 = vmatprep.subr.bf16.mxu0 0
    %226 = vmatpush1.bf16.msra.mxu0 %v201
    %227 = vmatprep.subr.bf16.mxu0 0
    %228 = vmatpush1.bf16.msra.mxu0 %v200
    %229 = vmatprep.subr.bf16.mxu0 0
    %230 = vmatpush1.bf16.msra.mxu0 %v199
    %231 = vmatprep.subr.bf16.mxu0 0
    %232 = vmatpush2.bf16.msra.mxu0 0
    %233 = vmatprep.subr.bf16.mxu0 0
    %234 = vmatpush2.bf16.msra.mxu0 0
    %235 = vmatprep.subr.bf16.mxu0 0
    %236 = vmatpush2.bf16.msra.mxu0 0
    %237 = vmatprep.subr.bf16.mxu0 0
    %238 = vmatpush2.bf16.msra.mxu0 0
    %239 = vmatprep.subr.bf16.mxu0 0
    %240 = vmatpush2.bf16.msra.mxu0 0
    %241 = vmatprep.subr.bf16.mxu0 0
    %242 = vmatpush2.bf16.msra.mxu0 0
    %243 = vmatprep.subr.bf16.mxu0 0
    %244 = vmatpush2.bf16.msra.mxu0 0
    %245 = vmatprep.subr.bf16.mxu0 0
    %246 = vmatpush2.bf16.msra.mxu0 0
    %247 = vmatprep.mubr.bf16.mxu0 0
    %248 = vmatmul.mubr.bf16.gmra.mxu0 %v151
    %v249 = vpop.f32.mrf.mxu0
    %v250 = vadd.f32 0.0, %v249
    %v251 = vpop.f32.mrf.mxu0
    %v252 = vpop.f32.mrf.mxu0
    %v253 = vadd.f32 0.0, %v252
    %v254 = vpop.f32.mrf.mxu0
    %255 = vmatprep.mubr.bf16.mxu0 0
    %256 = vmatmul.mubr.bf16.gmra.mxu0 %v152
    %v257 = vpop.f32.mrf.mxu0
    %v258 = vadd.f32 0.0, %v257
    %v259 = vpop.f32.mrf.mxu0
    %v260 = vpop.f32.mrf.mxu0
    %v261 = vadd.f32 0.0, %v260
    %v262 = vpop.f32.mrf.mxu0
    %263 = vmatprep.mubr.bf16.mxu0 0
    %264 = vmatmul.mubr.bf16.gmra.mxu0 %v153
    %v265 = vpop.f32.mrf.mxu0
    %v266 = vadd.f32 0.0, %v265
    %v267 = vpop.f32.mrf.mxu0
    %v268 = vpop.f32.mrf.mxu0
    %v269 = vadd.f32 0.0, %v268
    %v270 = vpop.f32.mrf.mxu0
    %271 = vmatprep.mubr.bf16.mxu0 0
    %272 = vmatmul.mubr.bf16.gmra.mxu0 %v154
    %v273 = vpop.f32.mrf.mxu0
    %v274 = vadd.f32 0.0, %v273
    %v275 = vpop.f32.mrf.mxu0
    %v276 = vpop.f32.mrf.mxu0
    %v277 = vadd.f32 0.0, %v276
    %v278 = vpop.f32.mrf.mxu0
    %279 = vmatprep.mubr.bf16.mxu0 0
    %280 = vmatmul.mubr.bf16.gmra.mxu0 %v155
    %v281 = vpop.f32.mrf.mxu0
    %v282 = vadd.f32 0.0, %v281
    %v283 = vpop.f32.mrf.mxu0
    %v284 = vpop.f32.mrf.mxu0
    %v285 = vadd.f32 0.0, %v284
    %v286 = vpop.f32.mrf.mxu0
    %287 = vmatprep.mubr.bf16.mxu0 0
    %288 = vmatmul.mubr.bf16.gmra.mxu0 %v156
    %v289 = vpop.f32.mrf.mxu0
    %v290 = vadd.f32 0.0, %v289
    %v291 = vpop.f32.mrf.mxu0
    %v292 = vpop.f32.mrf.mxu0
    %v293 = vadd.f32 0.0, %v292
    %v294 = vpop.f32.mrf.mxu0
    %295 = vmatprep.mubr.bf16.mxu0 0
    %296 = vmatmul.mubr.bf16.gmra.mxu0 %v157
    %v297 = vpop.f32.mrf.mxu0
    %v298 = vadd.f32 0.0, %v297
    %v299 = vpop.f32.mrf.mxu0
    %v300 = vpop.f32.mrf.mxu0
    %v301 = vadd.f32 0.0, %v300
    %v302 = vpop.f32.mrf.mxu0
    %303 = vmatprep.mubr.bf16.mxu0 0
    %304 = vmatmul.mubr.bf16.gmra.mxu0 %v158
    %v305 = vpop.f32.mrf.mxu0
    %v306 = vadd.f32 0.0, %v305
    %v307 = vpop.f32.mrf.mxu0
    %v308 = vpop.f32.mrf.mxu0
    %v309 = vadd.f32 0.0, %v308
    %v310 = vpop.f32.mrf.mxu0
    %311 = vdwg.mxu0
    %v312 = vpack.c.bf16 %v253, %v250
    %v313 = vpack.c.bf16 %v261, %v258
    %v314 = vpack.c.bf16 %v269, %v266
    %v315 = vpack.c.bf16 %v277, %v274
    %v316 = vpack.c.bf16 %v285, %v282
    %v317 = vpack.c.bf16 %v293, %v290
    %v318 = vpack.c.bf16 %v301, %v298
    %v319 = vpack.c.bf16 %v309, %v306
    %v320 = vld [vmem:[#allocation2] sm:$0xff]
    %v321 = vld [vmem:[#allocation2 + $0x8] sm:$0xff]
    %v322 = vld [vmem:[#allocation2 + $0x10] sm:$0xff]
    %v323 = vld [vmem:[#allocation2 + $0x18] sm:$0xff]
    %v324 = vld [vmem:[#allocation2 + $0x20] sm:$0xff]
    %v325 = vld [vmem:[#allocation2 + $0x28] sm:$0xff]
    %v326 = vld [vmem:[#allocation2 + $0x30] sm:$0xff]
    %v327 = vld [vmem:[#allocation2 + $0x38] sm:$0xff]
    %v328 = vld [vmem:[#allocation6] sm:$0xf]
    %v329 = vld [vmem:[#allocation6 + $0x4] sm:$0xf]
    %v330 = vld [vmem:[#allocation6 + $0x8] sm:$0xf]
    %v331 = vld [vmem:[#allocation6 + $0xc] sm:$0xf]
    %v332 = vld [vmem:[#allocation6 + $0x10] sm:$0xf]
    %v333 = vld [vmem:[#allocation6 + $0x14] sm:$0xf]
    %v334 = vld [vmem:[#allocation6 + $0x18] sm:$0xf]
    %v335 = vld [vmem:[#allocation6 + $0x1c] sm:$0xf]
    %v344 = vunpack.c.l.b16 %v328
    %v345 = vunpack.c.l.b16 %v329
    %v346 = vunpack.c.l.b16 %v330
    %v347 = vunpack.c.l.b16 %v331
    %v348 = vunpack.c.l.b16 %v332
    %v349 = vunpack.c.l.b16 %v333
    %v350 = vunpack.c.l.b16 %v334
    %v351 = vunpack.c.l.b16 %v335
    %v352 = vpack.c.b16 %v345, %v344
    %v353 = vpack.c.b16 %v347, %v346
    %v354 = vpack.c.b16 %v349, %v348
    %v355 = vpack.c.b16 %v351, %v350
    %360 = vmatprep.subr.bf16.mxu0 0
    %361 = vmatpush1.bf16.msra.mxu0 %v319
    %362 = vmatprep.subr.bf16.mxu0 0
    %363 = vmatpush1.bf16.msra.mxu0 %v318
    %364 = vmatprep.subr.bf16.mxu0 0
    %365 = vmatpush1.bf16.msra.mxu0 %v317
    %366 = vmatprep.subr.bf16.mxu0 0
    %367 = vmatpush1.bf16.msra.mxu0 %v316
    %368 = vmatprep.subr.bf16.mxu0 0
    %369 = vmatpush1.bf16.msra.mxu0 %v315
    %370 = vmatprep.subr.bf16.mxu0 0
    %371 = vmatpush1.bf16.msra.mxu0 %v314
    %372 = vmatprep.subr.bf16.mxu0 0
    %373 = vmatpush1.bf16.msra.mxu0 %v313
    %374 = vmatprep.subr.bf16.mxu0 0
    %375 = vmatpush1.bf16.msra.mxu0 %v312
    %376 = vmatprep.subr.bf16.mxu0 0
    %377 = vmatpush2.bf16.msra.mxu0 0
    %378 = vmatprep.subr.bf16.mxu0 0
    %379 = vmatpush2.bf16.msra.mxu0 0
    %380 = vmatprep.subr.bf16.mxu0 0
    %381 = vmatpush2.bf16.msra.mxu0 0
    %382 = vmatprep.subr.bf16.mxu0 0
    %383 = vmatpush2.bf16.msra.mxu0 0
    %384 = vmatprep.subr.bf16.mxu0 0
    %385 = vmatpush2.bf16.msra.mxu0 0
    %386 = vmatprep.subr.bf16.mxu0 0
    %387 = vmatpush2.bf16.msra.mxu0 0
    %388 = vmatprep.subr.bf16.mxu0 0
    %389 = vmatpush2.bf16.msra.mxu0 0
    %390 = vmatprep.subr.bf16.mxu0 0
    %391 = vmatpush2.bf16.msra.mxu0 0
    %392 = vmatprep.mubr.bf16.mxu0 0
    %393 = vmatmul.mubr.bf16.gmra.mxu0 %v352
    %v394 = vpop.f32.mrf.mxu0
    %v395 = vadd.f32 0.0, %v394
    %v396 = vpop.f32.mrf.mxu0
    %v397 = vpop.f32.mrf.mxu0
    %v398 = vadd.f32 0.0, %v397
    %v399 = vpop.f32.mrf.mxu0
    %400 = vmatprep.mubr.bf16.mxu0 0
    %401 = vmatmul.mubr.bf16.gmra.mxu0 %v353
    %v402 = vpop.f32.mrf.mxu0
    %v403 = vadd.f32 0.0, %v402
    %v404 = vpop.f32.mrf.mxu0
    %v405 = vpop.f32.mrf.mxu0
    %v406 = vadd.f32 0.0, %v405
    %v407 = vpop.f32.mrf.mxu0
    %408 = vmatprep.mubr.bf16.mxu0 0
    %409 = vmatmul.mubr.bf16.gmra.mxu0 %v354
    %v410 = vpop.f32.mrf.mxu0
    %v411 = vadd.f32 0.0, %v410
    %v412 = vpop.f32.mrf.mxu0
    %v413 = vpop.f32.mrf.mxu0
    %v414 = vadd.f32 0.0, %v413
    %v415 = vpop.f32.mrf.mxu0
    %416 = vmatprep.mubr.bf16.mxu0 0
    %417 = vmatmul.mubr.bf16.gmra.mxu0 %v355
    %v418 = vpop.f32.mrf.mxu0
    %v419 = vadd.f32 0.0, %v418
    %v420 = vpop.f32.mrf.mxu0
    %v421 = vpop.f32.mrf.mxu0
    %v422 = vadd.f32 0.0, %v421
    %v423 = vpop.f32.mrf.mxu0
    %424 = vdwg.mxu0
    %v425 = vadd.f32 %v320, %v395
    %v426 = vadd.f32 %v321, %v398
    %v427 = vadd.f32 %v322, %v403
    %v428 = vadd.f32 %v323, %v406
    %v429 = vadd.f32 %v324, %v411
    %v430 = vadd.f32 %v325, %v414
    %v431 = vadd.f32 %v326, %v419
    %v432 = vadd.f32 %v327, %v422
    %433 = vst [vmem:[#allocation2] sm:$0xff] %v425
    %434 = vst [vmem:[#allocation2 + $0x8] sm:$0xff] %v426
    %435 = vst [vmem:[#allocation2 + $0x10] sm:$0xff] %v427
    %436 = vst [vmem:[#allocation2 + $0x18] sm:$0xff] %v428
    %437 = vst [vmem:[#allocation2 + $0x20] sm:$0xff] %v429
    %438 = vst [vmem:[#allocation2 + $0x28] sm:$0xff] %v430
    %439 = vst [vmem:[#allocation2 + $0x30] sm:$0xff] %v431
    %440 = vst [vmem:[#allocation2 + $0x38] sm:$0xff] %v432
    // Predicated region
    $region34: #{tpu_custom_call.1} parent=1 // pred_check
      %p441 = pneg %p75
    $region35: #{tpu_custom_call.1} parent=1 // pred_check_branch
      %443 = sbr.rel (%p441) target = $region37
    $region36: #{tpu_custom_call.1} parent=1 // pred_region
      %v444 = vld [vmem:[#allocation2] sm:$0xff]
      %v445 = vld [vmem:[#allocation2 + $0x8] sm:$0xff]
      %v446 = vld [vmem:[#allocation2 + $0x10] sm:$0xff]
      %v447 = vld [vmem:[#allocation2 + $0x18] sm:$0xff]
      %v448 = vld [vmem:[#allocation2 + $0x20] sm:$0xff]
      %v449 = vld [vmem:[#allocation2 + $0x28] sm:$0xff]
      %v450 = vld [vmem:[#allocation2 + $0x30] sm:$0xff]
      %v451 = vld [vmem:[#allocation2 + $0x38] sm:$0xff]
      %v452 = vld [vmem:[%s5] sm:$0x1]
      %v454 = vlaneseq
      %v455 = vshrl.u32 %v454, 7
      %v456 = vsub.s32 0, %v455
      %v457 = vrot.slane %v452, %v456
      %v459 = vadd.f32 %v444, %v457
      %v460 = vadd.f32 %v445, %v457
      %v461 = vadd.f32 %v446, %v457
      %v462 = vadd.f32 %v447, %v457
      %v463 = vadd.f32 %v448, %v457
      %v464 = vadd.f32 %v449, %v457
      %v465 = vadd.f32 %v450, %v457
      %v466 = vadd.f32 %v451, %v457
      %v467 = vmax.f32 %v459, 0.0
      %v468 = vmax.f32 %v460, 0.0
      %v469 = vmax.f32 %v461, 0.0
      %v470 = vmax.f32 %v462, 0.0
      %v471 = vmax.f32 %v463, 0.0
      %v472 = vmax.f32 %v464, 0.0
      %v473 = vmax.f32 %v465, 0.0
      %v474 = vmax.f32 %v466, 0.0
      %v475 = vpack.c.bf16 %v468, %v467
      %v476 = vpack.c.bf16 %v470, %v469
      %v477 = vpack.c.bf16 %v472, %v471
      %v478 = vpack.c.bf16 %v474, %v473
      %v483 = vunpack.c.l.b16 %v475
      %v484 = vunpack.c.h.b16 %v475
      %v485 = vunpack.c.l.b16 %v476
      %v486 = vunpack.c.h.b16 %v476
      %v487 = vunpack.c.l.b16 %v477
      %v488 = vunpack.c.h.b16 %v477
      %v489 = vunpack.c.l.b16 %v478
      %v490 = vunpack.c.h.b16 %v478
      %v491 = vpack.c.b16 %v483, %v483
      %v492 = vpack.c.b16 %v484, %v484
      %v493 = vpack.c.b16 %v485, %v485
      %v494 = vpack.c.b16 %v486, %v486
      %v495 = vpack.c.b16 %v487, %v487
      %v496 = vpack.c.b16 %v488, %v488
      %v497 = vpack.c.b16 %v489, %v489
      %v498 = vpack.c.b16 %v490, %v490
      %507 = vst [vmem:[#allocation12] sm:$0xf] %v491
      %508 = vst [vmem:[#allocation12 + $0x4] sm:$0xf] %v492
      %509 = vst [vmem:[#allocation12 + $0x8] sm:$0xf] %v493
      %510 = vst [vmem:[#allocation12 + $0xc] sm:$0xf] %v494
      %511 = vst [vmem:[#allocation12 + $0x10] sm:$0xf] %v495
      %512 = vst [vmem:[#allocation12 + $0x14] sm:$0xf] %v496
      %513 = vst [vmem:[#allocation12 + $0x18] sm:$0xf] %v497
      %514 = vst [vmem:[#allocation12 + $0x1c] sm:$0xf] %v498
    $region37: #{tpu_custom_call.1} parent=1 // pred_fallthru
      _
    // Predicated region
    $region38: #{tpu_custom_call.1} parent=1 // pred_check
      _
    $region39: #{tpu_custom_call.1} parent=1 // pred_check_branch
      %516 = sbr.rel (0) target = $region41
    $region40: #{tpu_custom_call.1} parent=1 // pred_region
      %s518 = ssub.s32 512, 512
      %519 = vsyncadd [#allocation8], %s518
      %s520 = sshll.u32 [#allocation12], 4
      %s521 = int_to_ptr.vmem [resolvable:$true] %s520
      %526 = dma.vmem_to_hbm [thread:$0]  %s521, 512, %s6, [#allocation8], 64, 64, 4
    $region41: #{tpu_custom_call.1} parent=1 // pred_fallthru
      _
    // Predicated region
    $region42: #{tpu_custom_call.1} parent=1 // pred_check
      _
    $region43: #{tpu_custom_call.1} parent=1 // pred_check_branch
      %528 = sbr.rel (0) target = $region45
    $region44: #{tpu_custom_call.1} parent=1 // pred_region
      %529 = dma.done [#allocation8], 512
    $region45: #{tpu_custom_call.1} parent=1 // pred_fallthru
      _
    %530 = vsyncpa [#allocation7], 1
    %531 = vsyncpa [#allocation10], 1
    %532 = vsyncpa [#allocation8], 1

</llo_original>
